<compile_context>
chip_gen: v7x
topology: tpu7x:2x2x1
jax: 0.10.0
libtpu: 0.0.40
codegen_flags: <defaults>
</compile_context>

<pallas_src>
import jax
import jax.numpy as jnp
from jax.experimental import pallas as pl
from jax.experimental.pallas import tpu as pltpu

CHN_AXIS = 1
CHN_NUM = 4
UINT8_MAX = 255.0
UINT8_MIN = 0.0

_TARGET_TILE_BYTES = 4 << 20   # per f32 input data tile
_MAX_COL_TILE = 8192           # lanes per column tile (multiple of 128)
_VMEM_LIMIT_BYTES = 32 << 20   # explicit scoped-VMEM limit (safe on v5e/v6e/v7x)


def _fake_quant_kernel(x_ref, p_ref, o_ref):
    # x_ref: (tile_rows, tile_cols) f32
    # p_ref: (tile_rows, 4)         f32 -- columns: [inv_scale, scale, lo, hi]
    x = x_ref[...]
    p = p_ref[...]
    inv_s = p[:, 0:1]
    s = p[:, 1:2]
    lo = p[:, 2:3]   # = UINT8_MIN - zero_point
    hi = p[:, 3:4]   # = UINT8_MAX - zero_point
    # clamp(round(x*inv_s) + z, 0, 255) - z  ==  clamp(round(x*inv_s), -z, 255-z)
    q = jnp.round(x * inv_s)                 # round-half-to-even == nearbyint
    q = jnp.minimum(jnp.maximum(q, lo), hi)
    o_ref[...] = q * s


def _choose_tile_cols(cols):
    return cols if cols <= _MAX_COL_TILE else _MAX_COL_TILE


def _choose_tile_rows(rows, tile_cols):
    if rows <= 8:
        return rows                          # full-extent row block (always legal)
    bytes_per_row = tile_cols * 4
    target = max(8, (_TARGET_TILE_BYTES // bytes_per_row) // 8 * 8)
    # Encourage >= 2 row steps so the 'parallel' row axis can shard across the
    # two TensorCores on v7x once the input is big enough.
    half = (((rows + 1) // 2) + 7) // 8 * 8
    t = min(rows, target, max(8, half))
    return max(8, (t // 8) * 8)


def fake_quantize_per_channel_affine(x, scales, zero_points):
    """x: (N, C, H, W) f32, scales: (C,) f32, zero_points: (C,) int32."""
    N, C, H, W = x.shape

    s = scales.astype(jnp.float32)
    z = zero_points.astype(jnp.float32)
    # Packed per-channel params: [inv_scale, scale, lo, hi]  -> (C, 4)
    p_c = jnp.stack([1.0 / s, s, UINT8_MIN - z, UINT8_MAX - z], axis=-1)

    # Pick a factorization whose last dim is lane-dense (multiple of 128) when
    # possible; otherwise fall back to (N*C, H*W) with ragged column blocks.
    if (H * W) % 128 == 0 or W % 128 != 0:
        rows, cols = N * C, H * W
        params = jnp.broadcast_to(p_c[None], (N, C, 4)).reshape(rows, 4)
    else:
        rows, cols = N * C * H, W
        params = jnp.broadcast_to(p_c[None, :, None, :], (N, C, H, 4)).reshape(rows, 4)
    x2d = x.reshape(rows, cols).astype(jnp.float32)

    tile_cols = _choose_tile_cols(cols)
    tile_rows = _choose_tile_rows(rows, tile_cols)
    grid = (pl.cdiv(rows, tile_rows), pl.cdiv(cols, tile_cols))

    out2d = pl.pallas_call(
        _fake_quant_kernel,
        out_shape=jax.ShapeDtypeStruct((rows, cols), jnp.float32),
        grid=grid,
        in_specs=[
            pl.BlockSpec((tile_rows, tile_cols), lambda i, j: (i, j)),
            pl.BlockSpec((tile_rows, 4), lambda i, j: (i, 0)),
        ],
        out_specs=pl.BlockSpec((tile_rows, tile_cols), lambda i, j: (i, j)),
        compiler_params=pltpu.CompilerParams(
            dimension_semantics=("parallel", "parallel"),
            vmem_limit_bytes=_VMEM_LIMIT_BYTES,
        ),
        cost_estimate=pl.CostEstimate(
            flops=5 * rows * cols,
            transcendentals=0,
            bytes_accessed=8 * rows * cols + 16 * rows,
        ),
    )(x2d, params)

    return out2d.reshape(N, C, H, W)


if __name__ == "__main__":
    key = jax.random.PRNGKey(0)
    k_x, k_s, k_z = jax.random.split(key, 3)

    # input: (N=2, C=4, H=16, W=16), NCHW like PyTorch
    x = jax.random.normal(k_x, (2, CHN_NUM, 16, 16), dtype=jnp.float32)

    # deterministic parameter init mirroring the module's __init__ distributions
    # (scales made strictly positive for a well-defined quantization)
    scales = jnp.abs((jax.random.normal(k_s, (CHN_NUM,)) + 1.0) * 0.05) + 1e-3
    zero_points = (jax.random.normal(k_z, (CHN_NUM,)) * 5.0 + 127.0).astype(jnp.int32)

    # Pure-JAX reference (same inv_scale formulation as torch's fake_quantize kernel).
    inv_b = (1.0 / scales)[None, :, None, None].astype(jnp.float32)
    s_b = scales[None, :, None, None].astype(jnp.float32)
    z_b = zero_points[None, :, None, None].astype(jnp.float32)
    q_ref = jnp.clip(jnp.round(x * inv_b) + z_b, UINT8_MIN, UINT8_MAX)
    ref = (q_ref - z_b) * s_b
    ref = jax.block_until_ready(ref)

    out = fake_quantize_per_channel_affine(x, scales, zero_points)
    out = jax.block_until_ready(out)

    assert jnp.allclose(out, ref, atol=1e-6), "mismatch vs reference"

    print("KERNEL_OK")
</pallas_src>

<mosaic_0001>
module attributes {stable_mosaic.version = 11 : i64} {
  func.func @_fake_quant_kernel(%arg0: i32, %arg1: i32, %arg2: memref<8x256xf32, #tpu.memory_space<vmem>>, %arg3: memref<8x4xf32, #tpu.memory_space<vmem>>, %arg4: memref<8x256xf32, #tpu.memory_space<vmem>>) attributes {dimension_semantics = [#tpu.dimension_semantics<parallel>, #tpu.dimension_semantics<parallel>], iteration_bounds = array<i64: 1, 1>, scalar_prefetch = 0 : i64, scratch_operands = 0 : i64, tpu.core_type = #tpu.core_type<tc>, window_params = [{transform_indices = @transform_0, window_bounds = array<i64: 8, 256>}, {transform_indices = @transform_1, window_bounds = array<i64: 8, 4>}, {transform_indices = @transform_2, window_bounds = array<i64: 8, 256>}]} {
    %c0 = arith.constant 0 : index
    %c0_0 = arith.constant 0 : index
    %0 = vector.load %arg2[%c0, %c0_0] : memref<8x256xf32, #tpu.memory_space<vmem>>, vector<8x256xf32>
    %c0_1 = arith.constant 0 : index
    %c0_2 = arith.constant 0 : index
    %1 = vector.load %arg3[%c0_1, %c0_2] : memref<8x4xf32, #tpu.memory_space<vmem>>, vector<8x4xf32>
    %2 = vector.extract_strided_slice %1 {offsets = [0, 0], sizes = [8, 1], strides = [1, 1]} : vector<8x4xf32> to vector<8x1xf32>
    %3 = vector.extract_strided_slice %1 {offsets = [0, 1], sizes = [8, 1], strides = [1, 1]} : vector<8x4xf32> to vector<8x1xf32>
    %4 = vector.extract_strided_slice %1 {offsets = [0, 2], sizes = [8, 1], strides = [1, 1]} : vector<8x4xf32> to vector<8x1xf32>
    %5 = vector.extract_strided_slice %1 {offsets = [0, 3], sizes = [8, 1], strides = [1, 1]} : vector<8x4xf32> to vector<8x1xf32>
    %6 = vector.broadcast %2 : vector<8x1xf32> to vector<8x256xf32>
    %7 = arith.mulf %0, %6 : vector<8x256xf32>
    %8 = math.roundeven %7 : vector<8x256xf32>
    %9 = vector.broadcast %4 : vector<8x1xf32> to vector<8x256xf32>
    %10 = arith.maximumf %8, %9 : vector<8x256xf32>
    %11 = vector.broadcast %5 : vector<8x1xf32> to vector<8x256xf32>
    %12 = arith.minimumf %10, %11 : vector<8x256xf32>
    %13 = vector.broadcast %3 : vector<8x1xf32> to vector<8x256xf32>
    %14 = arith.mulf %12, %13 : vector<8x256xf32>
    %c0_3 = arith.constant 0 : index
    %c0_4 = arith.constant 0 : index
    %15 = vector.load %arg4[%c0_3, %c0_4] : memref<8x256xf32, #tpu.memory_space<vmem>>, vector<8x256xf32>
    tpu.vector_store %arg4[%c0_3, %c0_4], %14 {strides = array<i32>} : memref<8x256xf32, #tpu.memory_space<vmem>>, vector<8x256xf32>,
    return
  }
  func.func @transform_0(%arg0: i32, %arg1: i32) -> (i32, i32) {
    %c0_i32 = arith.constant 0 : i32
    return %arg0, %arg1 : i32, i32
  }
  func.func @transform_1(%arg0: i32, %arg1: i32) -> (i32, i32) {
    %c0_i32 = arith.constant 0 : i32
    %c0_i32_0 = arith.constant 0 : i32
    return %arg0, %c0_i32 : i32, i32
  }
  func.func @transform_2(%arg0: i32, %arg1: i32) -> (i32, i32) {
    %c0_i32 = arith.constant 0 : i32
    return %arg0, %arg1 : i32, i32
  }
}

</mosaic_0001>

<llo_original>
// kernel: tpu_custom_call.1
$region0: #{tpu_custom_call.1}
  #allocation0 [shape = 'u32[]', space=smem, size = 0x4, offset = 0x4, fixed_abs, tag = 'smem constant byte address 0x4 - core index']
  #allocation1 [shape = 'u32[144,128]{1,0:T(1,128)}', space=vmem, size = 0x12000, scoped, tag = 'internal scratch']
  %s0 = inlined_call_operand.hbm [shape: f32[8,256], index: 0, kind: input, shape index: {}]
  %s1 = inlined_call_operand.vmem [shape: f32[8,4], index: 1, kind: input, shape index: {}]
  %s2 = inlined_call_operand.hbm [shape: f32[8,256], index: 2, kind: output, shape index: {}]
  %s3 = sld [smem:[#allocation0]]
  $region22: #{tpu_custom_call.1} parent=0
    _
  %s5 = ssub.s32 1, %s3
  %s6 = scalar_select 0, %s5, %s3
  $region1: #{tpu_custom_call.1} parent=0
    #allocation2 [shape = 'u8[8192]{0}', space=vmem, size = 0x2000, scoped, tag = 'input window, operand 0, single buffered']
    #allocation3 [shape = 's32[1]{0}', space=sflag, size = 0x4, scoped, tag = 'scoped memory for tpu_custom_call.1']
    #allocation4 [shape = 's32[1]{0}', space=sflag, size = 0x4, scoped, tag = 'scoped memory for tpu_custom_call.1']
    #allocation5 [shape = 'u8[8192]{0}', space=vmem, size = 0x2000, scoped, tag = 'output window, operand 0, single buffered']
    %7 = vsyncpa [#allocation3], 0
    %8 = vsyncpa [#allocation4], 0
    // Predicated region
    $region2: #{tpu_custom_call.1} parent=1 // pred_check
      _
    $region3: #{tpu_custom_call.1} parent=1 // pred_check_branch
      %10 = sbr.rel (0) target = $region5
    $region4: #{tpu_custom_call.1} parent=1 // pred_region
      %s12 = ssub.s32 256, 256
      %13 = vsyncadd [#allocation3], %s12
      %s15 = sshll.u32 [#allocation2], 4
      %s16 = int_to_ptr.vmem [resolvable:$true] %s15
      %18 = dma.hbm_to_vmem [thread:$0]  %s0, 256, %s16, [#allocation3]
    $region5: #{tpu_custom_call.1} parent=1 // pred_fallthru
      _
    // Predicated region
    $region6: #{tpu_custom_call.1} parent=1 // pred_check
      _
    $region7: #{tpu_custom_call.1} parent=1 // pred_check_branch
      %20 = sbr.rel (0) target = $region9
    $region8: #{tpu_custom_call.1} parent=1 // pred_region
      _
    $region9: #{tpu_custom_call.1} parent=1 // pred_fallthru
      _
    // Predicated region
    $region10: #{tpu_custom_call.1} parent=1 // pred_check
      _
    $region11: #{tpu_custom_call.1} parent=1 // pred_check_branch
      %22 = sbr.rel (0) target = $region13
    $region12: #{tpu_custom_call.1} parent=1 // pred_region
      %23 = dma.done [#allocation3], 256
    $region13: #{tpu_custom_call.1} parent=1 // pred_fallthru
      _
    %v24 = vld [vmem:[#allocation2] sm:$0xff]
    %v25 = vld [vmem:[#allocation2 + $0x8] sm:$0xff]
    %v26 = vld [vmem:[%s1] sm:$0xff]
    %28 = vset.pattern.permute.xlu0 0
    %29 = vperm.xlu0 %28, %v26
    %v30 = vpop.permute.xlu0 %29
    %v32 = vmul.f32 %v24, %v30
    %v33 = vmul.f32 %v25, %v30
    %v34 = vround.ne.pseudo %v32
    %v35 = vround.ne.pseudo %v33
    %36 = vset.pattern.permute.xlu0 2
    %37 = vperm.xlu0 %36, %v26
    %v38 = vpop.permute.xlu0 %37
    %v40 = vmax.f32 %v34, %v38
    %v41 = vmax.f32 %v35, %v38
    %42 = vset.pattern.permute.xlu0 3
    %43 = vperm.xlu0 %42, %v26
    %v44 = vpop.permute.xlu0 %43
    %v46 = vmin.f32 %v40, %v44
    %v47 = vmin.f32 %v41, %v44
    %48 = vset.pattern.permute.xlu0 1
    %49 = vperm.xlu0 %48, %v26
    %v50 = vpop.permute.xlu0 %49
    %v52 = vmul.f32 %v46, %v50
    %v53 = vmul.f32 %v47, %v50
    %54 = vst [vmem:[#allocation5] sm:$0xff] %v52
    %55 = vst [vmem:[#allocation5 + $0x8] sm:$0xff] %v53
    // Predicated region
    $region14: #{tpu_custom_call.1} parent=1 // pred_check
      _
    $region15: #{tpu_custom_call.1} parent=1 // pred_check_branch
      %57 = sbr.rel (0) target = $region17
    $region16: #{tpu_custom_call.1} parent=1 // pred_region
      %s59 = ssub.s32 256, 256
      %60 = vsyncadd [#allocation4], %s59
      %s62 = sshll.u32 [#allocation5], 4
      %s63 = int_to_ptr.vmem [resolvable:$true] %s62
      %65 = dma.vmem_to_hbm [thread:$0]  %s63, 256, %s2, [#allocation4]
    $region17: #{tpu_custom_call.1} parent=1 // pred_fallthru
      _
    // Predicated region
    $region18: #{tpu_custom_call.1} parent=1 // pred_check
      _
    $region19: #{tpu_custom_call.1} parent=1 // pred_check_branch
      %67 = sbr.rel (0) target = $region21
    $region20: #{tpu_custom_call.1} parent=1 // pred_region
      %68 = dma.done [#allocation4], 256
    $region21: #{tpu_custom_call.1} parent=1 // pred_fallthru
      _
    %69 = vsyncpa [#allocation3], 1
    %70 = vsyncpa [#allocation4], 1

</llo_original>
